<compile_context>
chip_gen: v7x
topology: tpu7x:2x2x1
jax: 0.10.0
libtpu: 0.0.40
codegen_flags: <defaults>
</compile_context>

<pallas_src>
import functools
import math

import jax
import jax.numpy as jnp
import numpy as np
from jax import lax
from jax.experimental import pallas as pl
from jax.experimental.pallas import tpu as pltpu


# ----------------------------- Pallas kernel -------------------------------

def _autocorrelation_kernel(q_ref, k_ref, v_ref, wq_ref, wk_ref, wv_ref, wo_ref,
                            o_ref, *, bblk, seq_len, n_heads, d_keys, mxu_dtype):
    """One grid step = `bblk` whole batch elements, rows flattened to 2D.

    q/k/v : (rows, d_model)   rows = bblk * seq_len
    wq/wk : (d_model, H*dk)   W_q^T / W_k^T            (mxu_dtype)
    wv    : (d_model, H)      W_v^T  (per-head, not dk-repeated)
    wo    : (H, d_out)        W_o^T * 1/sqrt(dk)       (f32, exact/tiny)
    o     : (rows, d_out)
    """
    f32 = jnp.float32
    hdk = n_heads * d_keys
    rows = bblk * seq_len

    # Big projections: bf16 MXU operands, f32 accumulation.
    qa = q_ref[...].astype(mxu_dtype)
    ka = k_ref[...].astype(mxu_dtype)
    va = v_ref[...].astype(mxu_dtype)
    qp = jnp.dot(qa, wq_ref[...], preferred_element_type=f32)        # (rows, hdk)
    kp = jnp.dot(ka, wk_ref[...], preferred_element_type=f32)        # (rows, hdk)
    vp = jnp.dot(va, wv_ref[...], preferred_element_type=f32)        # (rows, H)

    # Tiny exact 0/1 head-selection matrices, built in-register (no extra inputs,
    # no dk-repeated weights in HBM/VMEM):
    #   expand[h, c]   = 1 iff lane c belongs to head h     (H, hdk)
    #   collapse[c, h] = 1 iff lane c belongs to head h     (hdk, H)
    h_ids = lax.broadcasted_iota(jnp.int32, (n_heads, hdk), 0)
    c_ids = lax.broadcasted_iota(jnp.int32, (n_heads, hdk), 1)
    expand = ((c_ids >= h_ids * d_keys) &
              (c_ids < (h_ids + 1) * d_keys)).astype(f32)
    r_ids = lax.broadcasted_iota(jnp.int32, (hdk, n_heads), 0)
    g_ids = lax.broadcasted_iota(jnp.int32, (hdk, n_heads), 1)
    collapse = ((r_ids >= g_ids * d_keys) &
                (r_ids < (g_ids + 1) * d_keys)).astype(f32)

    # Broadcast the per-head v value across that head's dk lanes.
    vpe = jnp.dot(vp, expand, preferred_element_type=f32)            # (rows, hdk)

    # Per-batch v-weighted query sum (segment sum over the seq_len rows of each
    # batch element in this block), broadcast back to every row of its batch.
    prod = qp * vpe                                                  # (rows, hdk)
    if bblk == 1:
        w = jnp.sum(prod, axis=0, keepdims=True)                     # (1, hdk)
        kw = kp * w                                                  # (rows, hdk)
    else:
        prod3 = prod.reshape(bblk, seq_len, hdk)
        w3 = jnp.sum(prod3, axis=1, keepdims=True)                   # (bblk,1,hdk)
        kw = (kp.reshape(bblk, seq_len, hdk) * w3).reshape(rows, hdk)

    # Collapse each head's dk lanes, then the (pre-scaled) output projection.
    hp = jnp.dot(kw, collapse, preferred_element_type=f32)           # (rows, H)
    o_ref[...] = jnp.dot(hp, wo_ref[...],
                         preferred_element_type=f32).astype(o_ref.dtype)


def _choose_bblk(B, L, target_rows=512):
    """Batches per block: whole batch elements, 8-aligned rows, ~target_rows rows,
    preferring an even block count >= 2 (dual-TensorCore friendly on v7x)."""
    valid = [d for d in range(1, B + 1) if B % d == 0 and (d * L) % 8 == 0]
    if not valid:
        return B                       # single full-array block (always legal)
    fitting = [d for d in valid if d * L <= target_rows] or [min(valid)]

    def score(d):
        n_blocks = B // d
        return (n_blocks >= 2 and n_blocks % 2 == 0, d * L)

    return max(fitting, key=score)


def auto_correlation_forward(queries, keys, values, attn_mask, params, *,
                             n_heads, d_keys, d_values,
                             mxu_dtype=jnp.bfloat16, target_rows=512):
    del attn_mask  # unused by the reference module's forward (kept for parity)
    B, L, d_model = queries.shape
    _, S, _ = keys.shape
    assert L == S, "simplified time_delay_agg requires L == S"
    assert d_values == 1, "module's view(B,L,-1) + W_o requires d_values == 1"
    H, dk = n_heads, d_keys
    hdk = H * dk
    scale = 1.0 / math.sqrt(dk)

    # Weight prep (all tiny; the whole forward is jitted by the caller so this
    # is folded once per compile, not recomputed per call).
    wq_t = params["W_q"].T.astype(mxu_dtype)                 # (d_model, hdk)
    wk_t = params["W_k"].T.astype(mxu_dtype)                 # (d_model, hdk)
    wv_t = params["W_v"].T.astype(mxu_dtype)                 # (d_model, H)
    wo_s = (params["W_o"].T * scale).astype(jnp.float32)     # (H, d_model)

    # Lane padding of the output feature axis only when it helps (>=128 and not
    # already a multiple of 128); small d_model writes its true width directly.
    if d_model >= 128 and d_model % 128 != 0:
        d_out = ((d_model + 127) // 128) * 128
        wo_s = jnp.pad(wo_s, ((0, 0), (0, d_out - d_model)))
    else:
        d_out = d_model

    bblk = _choose_bblk(B, L, target_rows)
    rows_blk = bblk * L
    n_blocks = B // bblk
    R = B * L

    q2 = queries.reshape(R, d_model)
    k2 = keys.reshape(R, d_model)
    v2 = values.reshape(R, d_model)

    kernel = functools.partial(_autocorrelation_kernel, bblk=bblk, seq_len=L,
                               n_heads=H, d_keys=dk, mxu_dtype=mxu_dtype)

    out2 = pl.pallas_call(
        kernel,
        out_shape=jax.ShapeDtypeStruct((R, d_out), queries.dtype),
        grid_spec=pltpu.PrefetchScalarGridSpec(
            num_scalar_prefetch=0,
            grid=(n_blocks,),
            in_specs=[
                pl.BlockSpec((rows_blk, d_model), lambda i: (i, 0)),  # q rows
                pl.BlockSpec((rows_blk, d_model), lambda i: (i, 0)),  # k rows
                pl.BlockSpec((rows_blk, d_model), lambda i: (i, 0)),  # v rows
                pl.BlockSpec((d_model, hdk), lambda i: (0, 0)),       # W_q^T
                pl.BlockSpec((d_model, hdk), lambda i: (0, 0)),       # W_k^T
                pl.BlockSpec((d_model, H), lambda i: (0, 0)),         # W_v^T (per-head)
                pl.BlockSpec((H, d_out), lambda i: (0, 0)),           # W_o^T * scale
            ],
            out_specs=pl.BlockSpec((rows_blk, d_out), lambda i: (i, 0)),
        ),
        compiler_params=pltpu.CompilerParams(
            dimension_semantics=("parallel",),
            vmem_limit_bytes=48 * 1024 * 1024),
    )(q2, k2, v2, wq_t, wk_t, wv_t, wo_s)

    if d_out != d_model:
        out2 = out2[:, :d_model]
    return out2.reshape(B, L, d_model)


# ------------------------ plain-JAX reference model ------------------------

def reference_forward(queries, keys, values, attn_mask, params,
                      *, n_heads, d_keys, d_values):
    """Literal transcription of AutoCorrelation.forward (PyTorch semantics)."""
    del attn_mask
    B, L, _ = queries.shape
    _, S, _ = keys.shape
    H = n_heads
    hi = jax.lax.Precision.HIGHEST

    q = jnp.matmul(queries, params["W_q"].T, precision=hi)
    k = jnp.matmul(keys, params["W_k"].T, precision=hi)
    v = jnp.matmul(values, params["W_v"].T, precision=hi)
    q = q.reshape(B, L, H, -1).transpose(0, 2, 1, 3)          # (B,H,L,dk)
    k = k.reshape(B, S, H, -1).transpose(0, 2, 1, 3)          # (B,H,S,dk)
    v = v.reshape(B, S, H, -1).transpose(0, 2, 1, 3)          # (B,H,S,dv)

    # self.correlation(queries, keys): scaled dot-product correlation map.
    corr = jnp.einsum("bhld,bhsd->bhls", q, k, precision=hi) / math.sqrt(d_keys)

    # time_delay_agg_training / _inference (identical):
    V = (v[..., None] * corr[..., None]).sum(axis=2)          # (B,H,S,1)
    V = V.transpose(0, 2, 1, 3).reshape(B, L, -1)             # (B,L,H*dv)
    return jnp.matmul(V, params["W_o"].T, precision=hi)       # (B,L,d_model)


# ---------------------------------- main -----------------------------------

if __name__ == "__main__":
    # Module hyperparameters (d_values=1 required for shape consistency).
    B, L, d_model, n_heads = 2, 16, 32, 4
    d_keys = d_model // n_heads          # 8 (PyTorch default)
    d_values = 1
    S = L

    key = jax.random.PRNGKey(0)
    kq, kk, kv, kwq, kwk, kwv, kwo = jax.random.split(key, 7)

    queries = jax.random.normal(kq, (B, L, d_model), dtype=jnp.float32)
    keys_in = jax.random.normal(kk, (B, S, d_model), dtype=jnp.float32)
    values_in = jax.random.normal(kv, (B, S, d_model), dtype=jnp.float32)
    attn_mask = None                      # ignored by the module's forward

    # Deterministic parameter init, PyTorch nn.Linear convention (out, in).
    def init_w(k, out_f, in_f):
        bound = 1.0 / math.sqrt(in_f)
        return jax.random.uniform(k, (out_f, in_f), jnp.float32, -bound, bound)

    params = {
        "W_q": init_w(kwq, d_keys * n_heads, d_model),
        "W_k": init_w(kwk, d_keys * n_heads, d_model),
        "W_v": init_w(kwv, d_values * n_heads, d_model),
        "W_o": init_w(kwo, d_model, d_values * n_heads),
    }

    fwd = jax.jit(functools.partial(auto_correlation_forward, n_heads=n_heads,
                                    d_keys=d_keys, d_values=d_values,
                                    mxu_dtype=jnp.bfloat16))
    out = fwd(queries, keys_in, values_in, attn_mask, params)
    out = jax.block_until_ready(out)

    ref = reference_forward(queries, keys_in, values_in, attn_mask, params,
                            n_heads=n_heads, d_keys=d_keys, d_values=d_values)
    ref = jax.block_until_ready(ref)

    assert out.shape == (B, L, d_model) and out.dtype == jnp.float32
    # bf16 MXU operands (f32 accumulation): ~1% relative error vs. the f32
    # HIGHEST-precision reference, so compare at 2e-2.
    np.testing.assert_allclose(np.asarray(out), np.asarray(ref),
                               rtol=2e-2, atol=2e-2)

    print("KERNEL_OK")
</pallas_src>

<mosaic_0001>
module attributes {stable_mosaic.version = 11 : i64} {
  func.func @_autocorrelation_kernel(%arg0: i32, %arg1: memref<16x32xf32, #tpu.memory_space<vmem>>, %arg2: memref<16x32xf32, #tpu.memory_space<vmem>>, %arg3: memref<16x32xf32, #tpu.memory_space<vmem>>, %arg4: memref<32x32xbf16, #tpu.memory_space<vmem>>, %arg5: memref<32x32xbf16, #tpu.memory_space<vmem>>, %arg6: memref<32x4xbf16, #tpu.memory_space<vmem>>, %arg7: memref<4x32xf32, #tpu.memory_space<vmem>>, %arg8: memref<16x32xf32, #tpu.memory_space<vmem>>) attributes {dimension_semantics = [#tpu.dimension_semantics<parallel>], iteration_bounds = array<i64: 2>, scalar_prefetch = 0 : i64, scratch_operands = 0 : i64, tpu.core_type = #tpu.core_type<tc>, window_params = [{transform_indices = @transform_0, window_bounds = array<i64: 16, 32>}, {transform_indices = @transform_1, window_bounds = array<i64: 16, 32>}, {transform_indices = @transform_2, window_bounds = array<i64: 16, 32>}, {pipeline_mode = #tpu.pipeline_mode<synchronous>, transform_indices = @transform_3, window_bounds = array<i64: 32, 32>}, {pipeline_mode = #tpu.pipeline_mode<synchronous>, transform_indices = @transform_4, window_bounds = array<i64: 32, 32>}, {pipeline_mode = #tpu.pipeline_mode<synchronous>, transform_indices = @transform_5, window_bounds = array<i64: 32, 4>}, {pipeline_mode = #tpu.pipeline_mode<synchronous>, transform_indices = @transform_6, window_bounds = array<i64: 4, 32>}, {transform_indices = @transform_7, window_bounds = array<i64: 16, 32>}]} {
    %c0 = arith.constant 0 : index
    %c0_0 = arith.constant 0 : index
    %0 = vector.load %arg1[%c0, %c0_0] : memref<16x32xf32, #tpu.memory_space<vmem>>, vector<16x32xf32>
    %1 = arith.truncf %0 : vector<16x32xf32> to vector<16x32xbf16>
    %c0_1 = arith.constant 0 : index
    %c0_2 = arith.constant 0 : index
    %2 = vector.load %arg2[%c0_1, %c0_2] : memref<16x32xf32, #tpu.memory_space<vmem>>, vector<16x32xf32>
    %3 = arith.truncf %2 : vector<16x32xf32> to vector<16x32xbf16>
    %c0_3 = arith.constant 0 : index
    %c0_4 = arith.constant 0 : index
    %4 = vector.load %arg3[%c0_3, %c0_4] : memref<16x32xf32, #tpu.memory_space<vmem>>, vector<16x32xf32>
    %5 = arith.truncf %4 : vector<16x32xf32> to vector<16x32xbf16>
    %c0_5 = arith.constant 0 : index
    %c0_6 = arith.constant 0 : index
    %6 = vector.load %arg4[%c0_5, %c0_6] : memref<32x32xbf16, #tpu.memory_space<vmem>>, vector<32x32xbf16>
    %cst = arith.constant dense<0.000000e+00> : vector<16x32xf32>
    %7 = tpu.matmul %1, %6, %cst {dimension_numbers = #tpu.dot_dimension_numbers<[1], [0], [0], [1], [0, 0, 1, 1], [], []>} : vector<16x32xbf16>, vector<32x32xbf16>, vector<16x32xf32> -> vector<16x32xf32>
    %c0_7 = arith.constant 0 : index
    %c0_8 = arith.constant 0 : index
    %8 = vector.load %arg5[%c0_7, %c0_8] : memref<32x32xbf16, #tpu.memory_space<vmem>>, vector<32x32xbf16>
    %cst_9 = arith.constant dense<0.000000e+00> : vector<16x32xf32>
    %9 = tpu.matmul %3, %8, %cst_9 {dimension_numbers = #tpu.dot_dimension_numbers<[1], [0], [0], [1], [0, 0, 1, 1], [], []>} : vector<16x32xbf16>, vector<32x32xbf16>, vector<16x32xf32> -> vector<16x32xf32>
    %c0_10 = arith.constant 0 : index
    %c0_11 = arith.constant 0 : index
    %10 = vector.load %arg6[%c0_10, %c0_11] : memref<32x4xbf16, #tpu.memory_space<vmem>>, vector<32x4xbf16>
    %cst_12 = arith.constant dense<0.000000e+00> : vector<16x4xf32>
    %11 = tpu.matmul %5, %10, %cst_12 {dimension_numbers = #tpu.dot_dimension_numbers<[1], [0], [0], [1], [0, 0, 1, 1], [], []>} : vector<16x32xbf16>, vector<32x4xbf16>, vector<16x4xf32> -> vector<16x4xf32>
    %12 = tpu.iota {dimensions = array<i32: 0>} : vector<4x32xi32>
    %13 = tpu.iota {dimensions = array<i32: 1>} : vector<4x32xi32>
    %c8_i32 = arith.constant 8 : i32
    %14 = vector.broadcast %c8_i32 : i32 to vector<4x32xi32>
    %15 = arith.muli %12, %14 : vector<4x32xi32>
    %16 = arith.cmpi sge, %13, %15 : vector<4x32xi32>
    %c1_i32 = arith.constant 1 : i32
    %17 = vector.broadcast %c1_i32 : i32 to vector<4x32xi32>
    %18 = arith.addi %12, %17 : vector<4x32xi32>
    %c8_i32_13 = arith.constant 8 : i32
    %19 = vector.broadcast %c8_i32_13 : i32 to vector<4x32xi32>
    %20 = arith.muli %18, %19 : vector<4x32xi32>
    %21 = arith.cmpi slt, %13, %20 : vector<4x32xi32>
    %22 = arith.andi %16, %21 : vector<4x32xi1>
    %23 = arith.extui %22 : vector<4x32xi1> to vector<4x32xi32>
    %24 = arith.sitofp %23 : vector<4x32xi32> to vector<4x32xf32>
    %25 = tpu.iota {dimensions = array<i32: 0>} : vector<32x4xi32>
    %26 = tpu.iota {dimensions = array<i32: 1>} : vector<32x4xi32>
    %c8_i32_14 = arith.constant 8 : i32
    %27 = vector.broadcast %c8_i32_14 : i32 to vector<32x4xi32>
    %28 = arith.muli %26, %27 : vector<32x4xi32>
    %29 = arith.cmpi sge, %25, %28 : vector<32x4xi32>
    %c1_i32_15 = arith.constant 1 : i32
    %30 = vector.broadcast %c1_i32_15 : i32 to vector<32x4xi32>
    %31 = arith.addi %26, %30 : vector<32x4xi32>
    %c8_i32_16 = arith.constant 8 : i32
    %32 = vector.broadcast %c8_i32_16 : i32 to vector<32x4xi32>
    %33 = arith.muli %31, %32 : vector<32x4xi32>
    %34 = arith.cmpi slt, %25, %33 : vector<32x4xi32>
    %35 = arith.andi %29, %34 : vector<32x4xi1>
    %36 = arith.extui %35 : vector<32x4xi1> to vector<32x4xi32>
    %37 = arith.sitofp %36 : vector<32x4xi32> to vector<32x4xf32>
    %cst_17 = arith.constant dense<0.000000e+00> : vector<16x32xf32>
    %38 = tpu.matmul %11, %24, %cst_17 {dimension_numbers = #tpu.dot_dimension_numbers<[1], [0], [0], [1], [0, 0, 1, 1], [], []>} : vector<16x4xf32>, vector<4x32xf32>, vector<16x32xf32> -> vector<16x32xf32>
    %39 = arith.mulf %7, %38 : vector<16x32xf32>
    %cst_18 = arith.constant dense<0.000000e+00> : vector<32xf32>
    %40 = vector.multi_reduction <add>, %39, %cst_18 [0] : vector<16x32xf32> to vector<32xf32>
    %41 = vector.shape_cast %40 : vector<32xf32> to vector<1x32xf32>
    %42 = vector.broadcast %41 : vector<1x32xf32> to vector<16x32xf32>
    %43 = arith.mulf %9, %42 : vector<16x32xf32>
    %cst_19 = arith.constant dense<0.000000e+00> : vector<16x4xf32>
    %44 = tpu.matmul %43, %37, %cst_19 {dimension_numbers = #tpu.dot_dimension_numbers<[1], [0], [0], [1], [0, 0, 1, 1], [], []>} : vector<16x32xf32>, vector<32x4xf32>, vector<16x4xf32> -> vector<16x4xf32>
    %c0_20 = arith.constant 0 : index
    %c0_21 = arith.constant 0 : index
    %45 = vector.load %arg7[%c0_20, %c0_21] : memref<4x32xf32, #tpu.memory_space<vmem>>, vector<4x32xf32>
    %cst_22 = arith.constant dense<0.000000e+00> : vector<16x32xf32>
    %46 = tpu.matmul %44, %45, %cst_22 {dimension_numbers = #tpu.dot_dimension_numbers<[1], [0], [0], [1], [0, 0, 1, 1], [], []>} : vector<16x4xf32>, vector<4x32xf32>, vector<16x32xf32> -> vector<16x32xf32>
    %c0_23 = arith.constant 0 : index
    %c0_24 = arith.constant 0 : index
    %47 = vector.load %arg8[%c0_23, %c0_24] : memref<16x32xf32, #tpu.memory_space<vmem>>, vector<16x32xf32>
    tpu.vector_store %arg8[%c0_23, %c0_24], %46 {strides = array<i32>} : memref<16x32xf32, #tpu.memory_space<vmem>>, vector<16x32xf32>,
    return
  }
  func.func @transform_0(%arg0: i32) -> (i32, i32) {
    %c0_i32 = arith.constant 0 : i32
    %c0_i32_0 = arith.constant 0 : i32
    return %arg0, %c0_i32 : i32, i32
  }
  func.func @transform_1(%arg0: i32) -> (i32, i32) {
    %c0_i32 = arith.constant 0 : i32
    %c0_i32_0 = arith.constant 0 : i32
    return %arg0, %c0_i32 : i32, i32
  }
  func.func @transform_2(%arg0: i32) -> (i32, i32) {
    %c0_i32 = arith.constant 0 : i32
    %c0_i32_0 = arith.constant 0 : i32
    return %arg0, %c0_i32 : i32, i32
  }
  func.func @transform_3(%arg0: i32) -> (i32, i32) {
    %c0_i32 = arith.constant 0 : i32
    %c0_i32_0 = arith.constant 0 : i32
    %c0_i32_1 = arith.constant 0 : i32
    return %c0_i32, %c0_i32_0 : i32, i32
  }
  func.func @transform_4(%arg0: i32) -> (i32, i32) {
    %c0_i32 = arith.constant 0 : i32
    %c0_i32_0 = arith.constant 0 : i32
    %c0_i32_1 = arith.constant 0 : i32
    return %c0_i32, %c0_i32_0 : i32, i32
  }
  func.func @transform_5(%arg0: i32) -> (i32, i32) {
    %c0_i32 = arith.constant 0 : i32
    %c0_i32_0 = arith.constant 0 : i32
    %c0_i32_1 = arith.constant 0 : i32
    return %c0_i32, %c0_i32_0 : i32, i32
  }
  func.func @transform_6(%arg0: i32) -> (i32, i32) {
    %c0_i32 = arith.constant 0 : i32
    %c0_i32_0 = arith.constant 0 : i32
    %c0_i32_1 = arith.constant 0 : i32
    return %c0_i32, %c0_i32_0 : i32, i32
  }
  func.func @transform_7(%arg0: i32) -> (i32, i32) {
    %c0_i32 = arith.constant 0 : i32
    %c0_i32_0 = arith.constant 0 : i32
    return %arg0, %c0_i32 : i32, i32
  }
}

</mosaic_0001>

<llo_original>
// kernel: auto_correlation_forward.1
$region0: #{auto_correlation_forward.1}
  #allocation0 [shape = 'u32[]', space=smem, size = 0x4, offset = 0x4, fixed_abs, tag = 'smem constant byte address 0x4 - core index']
  #allocation1 [shape = 'u32[144,128]{1,0:T(1,128)}', space=vmem, size = 0x12000, scoped, tag = 'internal scratch']
  %s0 = inlined_call_operand.vmem [shape: f32[32,32], index: 0, kind: input, shape index: {}]
  %s1 = inlined_call_operand.vmem [shape: f32[32,32], index: 1, kind: input, shape index: {}]
  %s2 = inlined_call_operand.vmem [shape: f32[32,32], index: 2, kind: input, shape index: {}]
  %s3 = inlined_call_operand.vmem [shape: bf16[32,32], index: 3, kind: input, shape index: {}]
  %s4 = inlined_call_operand.vmem [shape: bf16[32,32], index: 4, kind: input, shape index: {}]
  %s5 = inlined_call_operand.vmem [shape: bf16[32,4], index: 5, kind: input, shape index: {}]
  %s6 = inlined_call_operand.vmem [shape: f32[4,32], index: 6, kind: input, shape index: {}]
  %s7 = inlined_call_operand.hbm [shape: f32[32,32], index: 7, kind: output, shape index: {}]
  %s8 = sld [smem:[#allocation0]]
  $region61: #{auto_correlation_forward.1} parent=0
    _
  %s10 = ssub.s32 1, %s8
  %s11 = scalar_select 0, %s10, %s8
  $region1: #{auto_correlation_forward.1} parent=0
    #allocation2 [shape = 'u8[16384]{0}', space=vmem, size = 0x4000, scoped, tag = 'output window, operand 0']
    #allocation3 [shape = 's32[2]{0}', space=sflag, size = 0x8, scoped, tag = 'scoped memory for auto_correlation_forward.1']
    %12 = vsyncpa [#allocation3], 0
    %s13 = scalar_lea.sflag [#allocation3], 1
    %14 = vsyncpa %s13, 0
    loop: start=0, step=1, limit=4
    $region2: #{auto_correlation_forward.1} parent=1 // loop_pre_header
      _
    $region3: #{auto_correlation_forward.1} parent=1 // loop_header
      %s16 = sphi 0, %s20
      %p17 = scmp.ge.s32.totalorder %s16, 4
      %s26 = sphi 0, %s28
      %s29 = sphi 0, %s26
      %s30 = sphi 0, %s29
      %s46 = sphi 0, %s30
      %s52 = sphi 0, %s54
      %s55 = sphi 0, %s52
      %s56 = sphi 0, %s55
      %s72 = sphi 0, %s56
      %s78 = sphi 0, %s80
      %s81 = sphi 0, %s78
      %s82 = sphi 0, %s81
      %s98 = sphi 0, %s82
      %s102 = sphi 0, %s102
      %s104 = sphi 0, %s102
      %s105 = sphi 0, %s104
      %s119 = sphi 0, %s105
      %s123 = sphi 0, %s123
      %s125 = sphi 0, %s123
      %s126 = sphi 0, %s125
      %s140 = sphi 0, %s126
      %s144 = sphi 0, %s144
      %s146 = sphi 0, %s144
      %s147 = sphi 0, %s146
      %s161 = sphi 0, %s147
      %s165 = sphi 0, %s165
      %s167 = sphi 0, %s165
      %s168 = sphi 0, %s167
      %s182 = sphi 0, %s168
      %s188 = sphi 0, %s190
      %s191 = sphi 0, %s188
      %s192 = sphi 0, %s191
      %s208 = sphi 0, %s192
    $region4: #{auto_correlation_forward.1} parent=1 // loop_header_branch
      %19 = sbr.rel (%p17) target = $region8
    $region5: #{auto_correlation_forward.1} parent=1 // loop_body
      %s21 = ssub.s32 %s16, 1
      %s22 = ssub.s32 %s16, 2
      %s23 = sadd.s32 %s16, 1
      %s24 = ssub.s32 %s16, %s23
      %p25 = scmp.eq.s32.totalorder %s24, 0
      %s27 = sadd.s32 %s26, 1
      %s28 = scalar_select %p25, %s26, %s27
      %p31 = pneg %p25
      %p32 = scmp.eq.s32.totalorder %s16, 1
      %p33 = por %p31, %p32
      %p34 = scmp.ne.s32.totalorder %s26, %s29
      %p35 = scmp.eq.s32.totalorder %s16, 0
      %p36 = por %p34, %p35
      %p37 = scmp.ne.s32.totalorder %s26, %s29
      %p38 = scmp.eq.s32.totalorder %s21, 1
      %p39 = por %p37, %p38
      %p40 = scmp.ne.s32.totalorder %s29, %s30
      %p41 = scmp.eq.s32.totalorder %s21, 0
      %p42 = por %p40, %p41
      %p43 = scmp.ne.s32.totalorder %s29, %s30
      %p44 = scmp.eq.s32.totalorder %s22, 1
      %p45 = por %p43, %p44
      %p47 = scmp.ne.s32.totalorder %s30, %s46
      %p48 = scmp.eq.s32.totalorder %s22, 0
      %p49 = por %p47, %p48
      %s50 = ssub.s32 %s16, %s23
      %p51 = scmp.eq.s32.totalorder %s50, 0
      %s53 = sadd.s32 %s52, 1
      %s54 = scalar_select %p51, %s52, %s53
      %p57 = pneg %p51
      %p58 = scmp.eq.s32.totalorder %s16, 1
      %p59 = por %p57, %p58
      %p60 = scmp.ne.s32.totalorder %s52, %s55
      %p61 = scmp.eq.s32.totalorder %s16, 0
      %p62 = por %p60, %p61
      %p63 = scmp.ne.s32.totalorder %s52, %s55
      %p64 = scmp.eq.s32.totalorder %s21, 1
      %p65 = por %p63, %p64
      %p66 = scmp.ne.s32.totalorder %s55, %s56
      %p67 = scmp.eq.s32.totalorder %s21, 0
      %p68 = por %p66, %p67
      %p69 = scmp.ne.s32.totalorder %s55, %s56
      %p70 = scmp.eq.s32.totalorder %s22, 1
      %p71 = por %p69, %p70
      %p73 = scmp.ne.s32.totalorder %s56, %s72
      %p74 = scmp.eq.s32.totalorder %s22, 0
      %p75 = por %p73, %p74
      %s76 = ssub.s32 %s16, %s23
      %p77 = scmp.eq.s32.totalorder %s76, 0
      %s79 = sadd.s32 %s78, 1
      %s80 = scalar_select %p77, %s78, %s79
      %p83 = pneg %p77
      %p84 = scmp.eq.s32.totalorder %s16, 1
      %p85 = por %p83, %p84
      %p86 = scmp.ne.s32.totalorder %s78, %s81
      %p87 = scmp.eq.s32.totalorder %s16, 0
      %p88 = por %p86, %p87
      %p89 = scmp.ne.s32.totalorder %s78, %s81
      %p90 = scmp.eq.s32.totalorder %s21, 1
      %p91 = por %p89, %p90
      %p92 = scmp.ne.s32.totalorder %s81, %s82
      %p93 = scmp.eq.s32.totalorder %s21, 0
      %p94 = por %p92, %p93
      %p95 = scmp.ne.s32.totalorder %s81, %s82
      %p96 = scmp.eq.s32.totalorder %s22, 1
      %p97 = por %p95, %p96
      %p99 = scmp.ne.s32.totalorder %s82, %s98
      %p100 = scmp.eq.s32.totalorder %s22, 0
      %p101 = por %p99, %p100
      %s103 = sadd.s32 %s102, 1
      %p106 = scmp.eq.s32.totalorder %s16, 1
      %p107 = scmp.ne.s32.totalorder %s102, %s104
      %p108 = scmp.eq.s32.totalorder %s16, 0
      %p109 = por %p107, %p108
      %p110 = scmp.ne.s32.totalorder %s102, %s104
      %p111 = scmp.eq.s32.totalorder %s21, 1
      %p112 = por %p110, %p111
      %p113 = scmp.ne.s32.totalorder %s104, %s105
      %p114 = scmp.eq.s32.totalorder %s21, 0
      %p115 = por %p113, %p114
      %p116 = scmp.ne.s32.totalorder %s104, %s105
      %p117 = scmp.eq.s32.totalorder %s22, 1
      %p118 = por %p116, %p117
      %p120 = scmp.ne.s32.totalorder %s105, %s119
      %p121 = scmp.eq.s32.totalorder %s22, 0
      %p122 = por %p120, %p121
      %s124 = sadd.s32 %s123, 1
      %p127 = scmp.eq.s32.totalorder %s16, 1
      %p128 = scmp.ne.s32.totalorder %s123, %s125
      %p129 = scmp.eq.s32.totalorder %s16, 0
      %p130 = por %p128, %p129
      %p131 = scmp.ne.s32.totalorder %s123, %s125
      %p132 = scmp.eq.s32.totalorder %s21, 1
      %p133 = por %p131, %p132
      %p134 = scmp.ne.s32.totalorder %s125, %s126
      %p135 = scmp.eq.s32.totalorder %s21, 0
      %p136 = por %p134, %p135
      %p137 = scmp.ne.s32.totalorder %s125, %s126
      %p138 = scmp.eq.s32.totalorder %s22, 1
      %p139 = por %p137, %p138
      %p141 = scmp.ne.s32.totalorder %s126, %s140
      %p142 = scmp.eq.s32.totalorder %s22, 0
      %p143 = por %p141, %p142
      %s145 = sadd.s32 %s144, 1
      %p148 = scmp.eq.s32.totalorder %s16, 1
      %p149 = scmp.ne.s32.totalorder %s144, %s146
      %p150 = scmp.eq.s32.totalorder %s16, 0
      %p151 = por %p149, %p150
      %p152 = scmp.ne.s32.totalorder %s144, %s146
      %p153 = scmp.eq.s32.totalorder %s21, 1
      %p154 = por %p152, %p153
      %p155 = scmp.ne.s32.totalorder %s146, %s147
      %p156 = scmp.eq.s32.totalorder %s21, 0
      %p157 = por %p155, %p156
      %p158 = scmp.ne.s32.totalorder %s146, %s147
      %p159 = scmp.eq.s32.totalorder %s22, 1
      %p160 = por %p158, %p159
      %p162 = scmp.ne.s32.totalorder %s147, %s161
      %p163 = scmp.eq.s32.totalorder %s22, 0
      %p164 = por %p162, %p163
      %s166 = sadd.s32 %s165, 1
      %p169 = scmp.eq.s32.totalorder %s16, 1
      %p170 = scmp.ne.s32.totalorder %s165, %s167
      %p171 = scmp.eq.s32.totalorder %s16, 0
      %p172 = por %p170, %p171
      %p173 = scmp.ne.s32.totalorder %s165, %s167
      %p174 = scmp.eq.s32.totalorder %s21, 1
      %p175 = por %p173, %p174
      %p176 = scmp.ne.s32.totalorder %s167, %s168
      %p177 = scmp.eq.s32.totalorder %s21, 0
      %p178 = por %p176, %p177
      %p179 = scmp.ne.s32.totalorder %s167, %s168
      %p180 = scmp.eq.s32.totalorder %s22, 1
      %p181 = por %p179, %p180
      %p183 = scmp.ne.s32.totalorder %s168, %s182
      %p184 = scmp.eq.s32.totalorder %s22, 0
      %p185 = por %p183, %p184
      %s186 = ssub.s32 %s16, %s23
      %p187 = scmp.eq.s32.totalorder %s186, 0
      %s189 = sadd.s32 %s188, 1
      %s190 = scalar_select %p187, %s188, %s189
      %p193 = pneg %p187
      %p194 = scmp.eq.s32.totalorder %s16, 1
      %p195 = por %p193, %p194
      %p196 = scmp.ne.s32.totalorder %s188, %s191
      %p197 = scmp.eq.s32.totalorder %s16, 0
      %p198 = por %p196, %p197
      %p199 = scmp.ne.s32.totalorder %s188, %s191
      %p200 = scmp.eq.s32.totalorder %s21, 1
      %p201 = por %p199, %p200
      %p202 = scmp.ne.s32.totalorder %s191, %s192
      %p203 = scmp.eq.s32.totalorder %s21, 0
      %p204 = por %p202, %p203
      %p205 = scmp.ne.s32.totalorder %s191, %s192
      %p206 = scmp.eq.s32.totalorder %s22, 1
      %p207 = por %p205, %p206
      %p209 = scmp.ne.s32.totalorder %s192, %s208
      %p210 = scmp.eq.s32.totalorder %s22, 0
      %p211 = por %p209, %p210
      %p212 = scmp.le.s32.totalorder 1, %s16
      %p213 = scmp.lt.s32.totalorder %s16, 3
      %p214 = pnand %p212, %p213
      %p215 = pneg %p214
      // Predicated region
      $region9: #{auto_correlation_forward.1} parent=5 // pred_check
        _
      $region10: #{auto_correlation_forward.1} parent=5 // pred_check_branch
        %217 = sbr.rel (%p214) target = $region12
      $region11: #{auto_correlation_forward.1} parent=5 // pred_region
        %s218 = ssub.s32 %s16, 1
        // Predicated region
        $region13: #{auto_correlation_forward.1} parent=11 // pred_check
          %p219 = pneg %p115
        $region14: #{auto_correlation_forward.1} parent=11 // pred_check_branch
          %221 = sbr.rel (%p219) target = $region16
        $region15: #{auto_correlation_forward.1} parent=11 // pred_region
          _
        $region16: #{auto_correlation_forward.1} parent=11 // pred_fallthru
          _
        // Predicated region
        $region17: #{auto_correlation_forward.1} parent=11 // pred_check
          %p222 = pneg %p136
        $region18: #{auto_correlation_forward.1} parent=11 // pred_check_branch
          %224 = sbr.rel (%p222) target = $region20
        $region19: #{auto_correlation_forward.1} parent=11 // pred_region
          _
        $region20: #{auto_correlation_forward.1} parent=11 // pred_fallthru
          _
        // Predicated region
        $region21: #{auto_correlation_forward.1} parent=11 // pred_check
          %p225 = pneg %p157
        $region22: #{auto_correlation_forward.1} parent=11 // pred_check_branch
          %227 = sbr.rel (%p225) target = $region24
        $region23: #{auto_correlation_forward.1} parent=11 // pred_region
          _
        $region24: #{auto_correlation_forward.1} parent=11 // pred_fallthru
          _
        // Predicated region
        $region25: #{auto_correlation_forward.1} parent=11 // pred_check
          %p228 = pneg %p178
        $region26: #{auto_correlation_forward.1} parent=11 // pred_check_branch
          %230 = sbr.rel (%p228) target = $region28
        $region27: #{auto_correlation_forward.1} parent=11 // pred_region
          _
        $region28: #{auto_correlation_forward.1} parent=11 // pred_fallthru
          _
      $region12: #{auto_correlation_forward.1} parent=5 // pred_fallthru
        _
      %p231 = scmp.lt.s32.totalorder %s16, 2
      // Predicated region
      $region29: #{auto_correlation_forward.1} parent=5 // pred_check
        %p232 = pneg %p231
      $region30: #{auto_correlation_forward.1} parent=5 // pred_check_branch
        %234 = sbr.rel (%p232) target = $region32
      $region31: #{auto_correlation_forward.1} parent=5 // pred_region
        // Predicated region
        $region33: #{auto_correlation_forward.1} parent=31 // pred_check
          %p235 = pneg %p36
        $region34: #{auto_correlation_forward.1} parent=31 // pred_check_branch
          %237 = sbr.rel (%p235) target = $region36
        $region35: #{auto_correlation_forward.1} parent=31 // pred_region
          %s238 = smul.u32 2, %s16
          %p239 = scmp.lt.s32.totalorder %s238, 3
          %s240 = scalar_select %p239, %s238, 3
          %s241 = smul.addr %s240, 8
          %s242 = scalar_lea.vmem %s0, %s241
          %s243 = smul.u32 2, %s16
        $region36: #{auto_correlation_forward.1} parent=31 // pred_fallthru
          _
        // Predicated region
        $region37: #{auto_correlation_forward.1} parent=31 // pred_check
          %p244 = pneg %p62
        $region38: #{auto_correlation_forward.1} parent=31 // pred_check_branch
          %246 = sbr.rel (%p244) target = $region40
        $region39: #{auto_correlation_forward.1} parent=31 // pred_region
          %s247 = smul.u32 2, %s16
          %p248 = scmp.lt.s32.totalorder %s247, 3
          %s249 = scalar_select %p248, %s247, 3
          %s250 = smul.addr %s249, 8
          %s251 = scalar_lea.vmem %s1, %s250
          %s252 = smul.u32 2, %s16
        $region40: #{auto_correlation_forward.1} parent=31 // pred_fallthru
          _
        // Predicated region
        $region41: #{auto_correlation_forward.1} parent=31 // pred_check
          %p253 = pneg %p88
        $region42: #{auto_correlation_forward.1} parent=31 // pred_check_branch
          %255 = sbr.rel (%p253) target = $region44
        $region43: #{auto_correlation_forward.1} parent=31 // pred_region
          %s256 = smul.u32 2, %s16
          %p257 = scmp.lt.s32.totalorder %s256, 3
          %s258 = scalar_select %p257, %s256, 3
          %s259 = smul.addr %s258, 8
          %s260 = scalar_lea.vmem %s2, %s259
          %s261 = smul.u32 2, %s16
        $region44: #{auto_correlation_forward.1} parent=31 // pred_fallthru
          _
      $region32: #{auto_correlation_forward.1} parent=5 // pred_fallthru
        _
      %p262 = scmp.le.s32.totalorder 1, %s16
      %p263 = scmp.lt.s32.totalorder %s16, 3
      %p264 = pnand %p262, %p263
      %p265 = pneg %p264
      // Predicated region
      $region45: #{auto_correlation_forward.1} parent=5 // pred_check
        _
      $region46: #{auto_correlation_forward.1} parent=5 // pred_check_branch
        %267 = sbr.rel (%p264) target = $region48
      $region47: #{auto_correlation_forward.1} parent=5 // pred_region
        %s268 = ssub.s32 %s16, 1
        %s269 = smul.u32 2, %s21
        %p270 = scmp.lt.s32.totalorder %s269, 3
        %s271 = scalar_select %p270, %s269, 3
        %s272 = smul.addr %s271, 8
        %s273 = scalar_lea.vmem %s0, %s272
        %p274 = pneg %p42
        %p275 = pneg %p39
        %s276 = smul.u32 2, %s21
        %p277 = scmp.lt.s32.totalorder %s276, 3
        %s278 = scalar_select %p277, %s276, 3
        %s279 = smul.addr %s278, 8
        %s280 = scalar_lea.vmem %s1, %s279
        %p281 = pneg %p68
        %p282 = pneg %p65
        %s283 = smul.u32 2, %s21
        %p284 = scmp.lt.s32.totalorder %s283, 3
        %s285 = scalar_select %p284, %s283, 3
        %s286 = smul.addr %s285, 8
        %s287 = scalar_lea.vmem %s2, %s286
        %p288 = pneg %p94
        %p289 = pneg %p91
        %p290 = pneg %p115
        %p291 = pneg %p112
        %p292 = pneg %p136
        %p293 = pneg %p133
        %p294 = pneg %p157
        %p295 = pneg %p154
        %p296 = pneg %p178
        %p297 = pneg %p175
        %p298 = pneg %p204
        %p299 = pneg %p201
        %s300 = sand.u32 %s191, 1
        %s301 = scalar_lea.sflag [#allocation3], %s300
        %s302 = sand.u32 %s191, 1
        %s303 = smul.addr %s302, 16
        %s304 = scalar_lea.vmem [#allocation2], %s303
        %s305 = smul.u32 2, %s21
        %p306 = scmp.lt.s32.totalorder %s305, 3
        %s307 = scalar_select %p306, %s305, 3
        %s308 = smul.addr %s307, 8
        %s309 = scalar_lea.vmem %s0, %s308
        %s310 = smul.u32 2, %s21
        %s311 = smul.u32 2, %s21
        %p312 = scmp.lt.s32.totalorder %s311, 3
        %s313 = scalar_select %p312, %s311, 3
        %s314 = smul.addr %s313, 8
        %s315 = scalar_lea.vmem %s1, %s314
        %s316 = smul.u32 2, %s21
        %s317 = smul.u32 2, %s21
        %p318 = scmp.lt.s32.totalorder %s317, 3
        %s319 = scalar_select %p318, %s317, 3
        %s320 = smul.addr %s319, 8
        %s321 = scalar_lea.vmem %s2, %s320
        %s322 = smul.u32 2, %s21
        %s323 = smul.u32 2, %s21
        %v325 = vld [vmem:[%s309] sm:$0xff]
        %v326 = vld [vmem:[%s309 + $0x8] sm:$0xff]
        %v327 = vpack.c.bf16 %v326, %v325
        %v328 = vld [vmem:[%s315] sm:$0xff]
        %v329 = vld [vmem:[%s315 + $0x8] sm:$0xff]
        %v330 = vpack.c.bf16 %v329, %v328
        %v331 = vld [vmem:[%s321] sm:$0xff]
        %v332 = vld [vmem:[%s321 + $0x8] sm:$0xff]
        %v333 = vpack.c.bf16 %v332, %v331
        %v334 = vld [vmem:[%s3] sm:$0xf]
        %v335 = vld [vmem:[%s3 + $0x4] sm:$0xf]
        %v336 = vld [vmem:[%s3 + $0x8] sm:$0xf]
        %v337 = vld [vmem:[%s3 + $0xc] sm:$0xf]
        %v342 = vunpack.c.l.b16 %v334
        %v343 = vunpack.c.l.b16 %v335
        %v344 = vunpack.c.l.b16 %v336
        %v345 = vunpack.c.l.b16 %v337
        %v346 = vpack.c.b16 %v343, %v342
        %v347 = vpack.c.b16 %v345, %v344
        %vm350 = vcmask 261120
        %v352 = vsel %vm350, %v327, 0
        %354 = vmatprep.subr.bf16.mxu0 0
        %355 = vmatpush1.bf16.msra.mxu0 %v346
        %356 = vmatprep.subr.bf16.mxu0 0
        %357 = vmatpush1.bf16.msra.mxu0 %v347
        %358 = vmatprep.subr.bf16.mxu0 0
        %359 = vmatpush1.bf16.msra.mxu0 0
        %360 = vmatprep.subr.bf16.mxu0 0
        %361 = vmatpush1.bf16.msra.mxu0 0
        %362 = vmatprep.subr.bf16.mxu0 0
        %363 = vmatpush1.bf16.msra.mxu0 0
        %364 = vmatprep.subr.bf16.mxu0 0
        %365 = vmatpush1.bf16.msra.mxu0 0
        %366 = vmatprep.subr.bf16.mxu0 0
        %367 = vmatpush1.bf16.msra.mxu0 0
        %368 = vmatprep.subr.bf16.mxu0 0
        %369 = vmatpush1.bf16.msra.mxu0 0
        %370 = vmatprep.subr.bf16.mxu0 0
        %371 = vmatpush1.bf16.msra.mxu0 0
        %372 = vmatprep.subr.bf16.mxu0 0
        %373 = vmatpush1.bf16.msra.mxu0 0
        %374 = vmatprep.subr.bf16.mxu0 0
        %375 = vmatpush1.bf16.msra.mxu0 0
        %376 = vmatprep.subr.bf16.mxu0 0
        %377 = vmatpush1.bf16.msra.mxu0 0
        %378 = vmatprep.subr.bf16.mxu0 0
        %379 = vmatpush1.bf16.msra.mxu0 0
        %380 = vmatprep.subr.bf16.mxu0 0
        %381 = vmatpush1.bf16.msra.mxu0 0
        %382 = vmatprep.subr.bf16.mxu0 0
        %383 = vmatpush1.bf16.msra.mxu0 0
        %384 = vmatprep.subr.bf16.mxu0 0
        %385 = vmatpush1.bf16.msra.mxu0 0
        %386 = vmatprep.mubr.bf16.mxu0 0
        %387 = vmatmul.mubr.bf16.gmra.mrb[0].mxu0 %v352
        %v388 = vpop.f32.mrb[0].mxu0
        %v389 = vadd.f32 0.0, %v388
        %v390 = vpop.f32.mrb[0].mxu0
        %v391 = vpop.f32.mrb[0].mxu0
        %v392 = vadd.f32 0.0, %v391
        %v393 = vpop.f32.mrb[0].mxu0
        %394 = vdwg.mxu0
        %v395 = vld [vmem:[%s4] sm:$0xf]
        %v396 = vld [vmem:[%s4 + $0x4] sm:$0xf]
        %v397 = vld [vmem:[%s4 + $0x8] sm:$0xf]
        %v398 = vld [vmem:[%s4 + $0xc] sm:$0xf]
        %v403 = vunpack.c.l.b16 %v395
        %v404 = vunpack.c.l.b16 %v396
        %v405 = vunpack.c.l.b16 %v397
        %v406 = vunpack.c.l.b16 %v398
        %v407 = vpack.c.b16 %v404, %v403
        %v408 = vpack.c.b16 %v406, %v405
        %v412 = vsel %vm350, %v330, 0
        %414 = vmatprep.subr.bf16.mxu0 0
        %415 = vmatpush1.bf16.msra.mxu0 %v407
        %416 = vmatprep.subr.bf16.mxu0 0
        %417 = vmatpush1.bf16.msra.mxu0 %v408
        %418 = vmatprep.subr.bf16.mxu0 0
        %419 = vmatpush1.bf16.msra.mxu0 0
        %420 = vmatprep.subr.bf16.mxu0 0
        %421 = vmatpush1.bf16.msra.mxu0 0
        %422 = vmatprep.subr.bf16.mxu0 0
        %423 = vmatpush1.bf16.msra.mxu0 0
        %424 = vmatprep.subr.bf16.mxu0 0
        %425 = vmatpush1.bf16.msra.mxu0 0
        %426 = vmatprep.subr.bf16.mxu0 0
        %427 = vmatpush1.bf16.msra.mxu0 0
        %428 = vmatprep.subr.bf16.mxu0 0
        %429 = vmatpush1.bf16.msra.mxu0 0
        %430 = vmatprep.subr.bf16.mxu0 0
        %431 = vmatpush1.bf16.msra.mxu0 0
        %432 = vmatprep.subr.bf16.mxu0 0
        %433 = vmatpush1.bf16.msra.mxu0 0
        %434 = vmatprep.subr.bf16.mxu0 0
        %435 = vmatpush1.bf16.msra.mxu0 0
        %436 = vmatprep.subr.bf16.mxu0 0
        %437 = vmatpush1.bf16.msra.mxu0 0
        %438 = vmatprep.subr.bf16.mxu0 0
        %439 = vmatpush1.bf16.msra.mxu0 0
        %440 = vmatprep.subr.bf16.mxu0 0
        %441 = vmatpush1.bf16.msra.mxu0 0
        %442 = vmatprep.subr.bf16.mxu0 0
        %443 = vmatpush1.bf16.msra.mxu0 0
        %444 = vmatprep.subr.bf16.mxu0 0
        %445 = vmatpush1.bf16.msra.mxu0 0
        %446 = vmatprep.mubr.bf16.mxu0 0
        %447 = vmatmul.mubr.bf16.gmra.mrb[0].mxu0 %v412
        %v448 = vpop.f32.mrb[0].mxu0
        %v449 = vadd.f32 0.0, %v448
        %v450 = vpop.f32.mrb[0].mxu0
        %v451 = vpop.f32.mrb[0].mxu0
        %v452 = vadd.f32 0.0, %v451
        %v453 = vpop.f32.mrb[0].mxu0
        %454 = vdwg.mxu0
        %v455 = vld [vmem:[%s5] sm:$0xf]
        %v456 = vld [vmem:[%s5 + $0x4] sm:$0xf]
        %v457 = vld [vmem:[%s5 + $0x8] sm:$0xf]
        %v458 = vld [vmem:[%s5 + $0xc] sm:$0xf]
        %v463 = vunpack.c.l.b16 %v455
        %v464 = vunpack.c.l.b16 %v456
        %v465 = vunpack.c.l.b16 %v457
        %v466 = vunpack.c.l.b16 %v458
        %v467 = vpack.c.b16 %v464, %v463
        %v468 = vpack.c.b16 %v466, %v465
        %v472 = vsel %vm350, %v333, 0
        %474 = vmatprep.subr.bf16.mxu0 0
        %475 = vmatpush1.bf16.msra.mxu0 %v467
        %476 = vmatprep.subr.bf16.mxu0 0
        %477 = vmatpush1.bf16.msra.mxu0 %v468
        %478 = vmatprep.subr.bf16.mxu0 0
        %479 = vmatpush1.bf16.msra.mxu0 0
        %480 = vmatprep.subr.bf16.mxu0 0
        %481 = vmatpush1.bf16.msra.mxu0 0
        %482 = vmatprep.subr.bf16.mxu0 0
        %483 = vmatpush1.bf16.msra.mxu0 0
        %484 = vmatprep.subr.bf16.mxu0 0
        %485 = vmatpush1.bf16.msra.mxu0 0
        %486 = vmatprep.subr.bf16.mxu0 0
        %487 = vmatpush1.bf16.msra.mxu0 0
        %488 = vmatprep.subr.bf16.mxu0 0
        %489 = vmatpush1.bf16.msra.mxu0 0
        %490 = vmatprep.subr.bf16.mxu0 0
        %491 = vmatpush1.bf16.msra.mxu0 0
        %492 = vmatprep.subr.bf16.mxu0 0
        %493 = vmatpush1.bf16.msra.mxu0 0
        %494 = vmatprep.subr.bf16.mxu0 0
        %495 = vmatpush1.bf16.msra.mxu0 0
        %496 = vmatprep.subr.bf16.mxu0 0
        %497 = vmatpush1.bf16.msra.mxu0 0
        %498 = vmatprep.subr.bf16.mxu0 0
        %499 = vmatpush1.bf16.msra.mxu0 0
        %500 = vmatprep.subr.bf16.mxu0 0
        %501 = vmatpush1.bf16.msra.mxu0 0
        %502 = vmatprep.subr.bf16.mxu0 0
        %503 = vmatpush1.bf16.msra.mxu0 0
        %504 = vmatprep.subr.bf16.mxu0 0
        %505 = vmatpush1.bf16.msra.mxu0 0
        %506 = vmatprep.mubr.bf16.mxu0 0
        %507 = vmatmul.mubr.bf16.gmra.mrb[0].mxu0 %v472
        %v508 = vpop.f32.mrb[0].mxu0
        %v509 = vadd.f32 0.0, %v508
        %v510 = vpop.f32.mrb[0].mxu0
        %v511 = vpop.f32.mrb[0].mxu0
        %v512 = vadd.f32 0.0, %v511
        %v513 = vpop.f32.mrb[0].mxu0
        %514 = vdwg.mxu0
        %v515 = vlaneseq
        %v516 = vshrl.u32 %v515, 7
        %v517 = vlaneseq
        %v518 = vand.u32 %v517, 127
        %v519 = vmul.u32 %v516, 8
        %vm520 = vcmp.ge.s32.totalorder %v518, %v519
        %v521 = vadd.s32 %v516, 1
        %v522 = vmul.u32 %v521, 8
        %vm523 = vcmp.lt.s32.totalorder %v518, %v522
        %vm524 = vmand %vm520, %vm523
        %v525 = vsel %vm524, 1, 0
        %v526 = vcvt.s32.f32 %v525
        %v527 = vadd.s32 %v516, 8
        %v528 = vadd.s32 %v516, 16
        %v529 = vadd.s32 %v516, 24
        %v530 = vmul.u32 %v518, 8
        %vm531 = vcmp.ge.s32.totalorder %v516, %v530
        %vm532 = vcmp.ge.s32.totalorder %v527, %v530
        %vm533 = vcmp.ge.s32.totalorder %v528, %v530
        %vm534 = vcmp.ge.s32.totalorder %v529, %v530
        %v535 = vadd.s32 %v518, 1
        %v536 = vmul.u32 %v535, 8
        %vm537 = vcmp.lt.s32.totalorder %v516, %v536
        %vm538 = vcmp.lt.s32.totalorder %v527, %v536
        %vm539 = vcmp.lt.s32.totalorder %v528, %v536
        %vm540 = vcmp.lt.s32.totalorder %v529, %v536
        %vm541 = vmand %vm531, %vm537
        %vm542 = vmand %vm532, %vm538
        %vm543 = vmand %vm533, %vm539
        %vm544 = vmand %vm534, %vm540
        %v545 = vsel %vm541, 1, 0
        %v546 = vsel %vm542, 1, 0
        %v547 = vsel %vm543, 1, 0
        %v548 = vsel %vm544, 1, 0
        %v549 = vcvt.s32.f32 %v545
        %v550 = vcvt.s32.f32 %v546
        %v551 = vcvt.s32.f32 %v547
        %v552 = vcvt.s32.f32 %v548
        %vm553 = vcmask 31744
        %v555 = vsel %vm553, %v509, 0
        %v558 = vsel %vm553, %v512, 0
        %vm560 = vcmask 1043456
        %v562 = vsel %vm560, %v526, 0
        %564 = vmatprep.subr.mxu0 0.0
        %565 = vmatpush1.msra.mxu0 %v562
        %566 = vmatprep.subr.mxu0 0.0
        %567 = vmatpush1.msra.mxu0 0.0
        %568 = vmatprep.subr.mxu0 0.0
        %569 = vmatpush1.msra.mxu0 0.0
        %570 = vmatprep.subr.mxu0 0.0
        %571 = vmatpush1.msra.mxu0 0.0
        %572 = vmatprep.subr.mxu0 0.0
        %573 = vmatpush1.msra.mxu0 0.0
        %574 = vmatprep.subr.mxu0 0.0
        %575 = vmatpush1.msra.mxu0 0.0
        %576 = vmatprep.subr.mxu0 0.0
        %577 = vmatpush1.msra.mxu0 0.0
        %578 = vmatprep.subr.mxu0 0.0
        %579 = vmatpush1.msra.mxu0 0.0
        %580 = vmatprep.subr.mxu0 0.0
        %581 = vmatpush1.msra.mxu0 0.0
        %582 = vmatprep.subr.mxu0 0.0
        %583 = vmatpush1.msra.mxu0 0.0
        %584 = vmatprep.subr.mxu0 0.0
        %585 = vmatpush1.msra.mxu0 0.0
        %586 = vmatprep.subr.mxu0 0.0
        %587 = vmatpush1.msra.mxu0 0.0
        %588 = vmatprep.subr.mxu0 0.0
        %589 = vmatpush1.msra.mxu0 0.0
        %590 = vmatprep.subr.mxu0 0.0
        %591 = vmatpush1.msra.mxu0 0.0
        %592 = vmatprep.subr.mxu0 0.0
        %593 = vmatpush1.msra.mxu0 0.0
        %594 = vmatprep.subr.mxu0 0.0
        %595 = vmatpush1.msra.mxu0 0.0
        %596 = vmatprep.subr.mxu0 0.0
        %597 = vmatpush1.msra.mxu0 0.0
        %598 = vmatprep.subr.mxu0 0.0
        %599 = vmatpush1.msra.mxu0 0.0
        %600 = vmatprep.subr.mxu0 0.0
        %601 = vmatpush1.msra.mxu0 0.0
        %602 = vmatprep.subr.mxu0 0.0
        %603 = vmatpush1.msra.mxu0 0.0
        %604 = vmatprep.subr.mxu0 0.0
        %605 = vmatpush1.msra.mxu0 0.0
        %606 = vmatprep.subr.mxu0 0.0
        %607 = vmatpush1.msra.mxu0 0.0
        %608 = vmatprep.subr.mxu0 0.0
        %609 = vmatpush1.msra.mxu0 0.0
        %610 = vmatprep.subr.mxu0 0.0
        %611 = vmatpush1.msra.mxu0 0.0
        %612 = vmatprep.subr.mxu0 0.0
        %613 = vmatpush1.msra.mxu0 0.0
        %614 = vmatprep.subr.mxu0 0.0
        %615 = vmatpush1.msra.mxu0 0.0
        %616 = vmatprep.subr.mxu0 0.0
        %617 = vmatpush1.msra.mxu0 0.0
        %618 = vmatprep.subr.mxu0 0.0
        %619 = vmatpush1.msra.mxu0 0.0
        %620 = vmatprep.subr.mxu0 0.0
        %621 = vmatpush1.msra.mxu0 0.0
        %622 = vmatprep.subr.mxu0 0.0
        %623 = vmatpush1.msra.mxu0 0.0
        %624 = vmatprep.subr.mxu0 0.0
        %625 = vmatpush1.msra.mxu0 0.0
        %626 = vmatprep.subr.mxu0 0.0
        %627 = vmatpush1.msra.mxu0 0.0
        %628 = vmatprep.mubr.f32.mxu0 0.0
        %629 = vmatmul.mubr.f32.gmra.mrb[0].mxu0 %v555
        %v630 = vpop.f32.mrb[0].mxu0
        %v631 = vadd.f32 0.0, %v630
        %v632 = vpop.f32.mrb[0].mxu0
        %633 = vmatprep.mubr.f32.mxu0 0.0
        %634 = vmatmul.mubr.f32.gmra.mrb[0].mxu0 %v558
        %v635 = vpop.f32.mrb[0].mxu0
        %v636 = vadd.f32 0.0, %v635
        %v637 = vpop.f32.mrb[0].mxu0
        %638 = vdwg.mxu0
        %v639 = vmul.f32 %v389, %v631
        %v640 = vmul.f32 %v392, %v636
        %v641 = vsel %vm350, %v639, 0.0
        %v642 = vsel %vm350, %v640, 0.0
        %v643 = vadd.f32 %v641, %v642
        %v644 = vrot.slane %v643, 4
        %v645 = vadd.f32 %v643, %v644
        %v646 = vrot.slane %v645, 2
        %v647 = vadd.f32 %v645, %v646
        %v648 = vrot.slane %v647, 1
        %v649 = vadd.f32 %v647, %v648
        %v650 = vmul.f32 %v449, %v649
        %v651 = vmul.f32 %v452, %v649
        %v653 = vsel %vm350, %v650, 0
        %v656 = vsel %vm350, %v651, 0
        %658 = vmatprep.subr.mxu0 0.0
        %659 = vmatpush1.msra.mxu0 %v549
        %660 = vmatprep.subr.mxu0 0.0
        %661 = vmatpush1.msra.mxu0 %v550
        %662 = vmatprep.subr.mxu0 0.0
        %663 = vmatpush1.msra.mxu0 %v551
        %664 = vmatprep.subr.mxu0 0.0
        %665 = vmatpush1.msra.mxu0 %v552
        %666 = vmatprep.subr.mxu0 0.0
        %667 = vmatpush1.msra.mxu0 0.0
        %668 = vmatprep.subr.mxu0 0.0
        %669 = vmatpush1.msra.mxu0 0.0
        %670 = vmatprep.subr.mxu0 0.0
        %671 = vmatpush1.msra.mxu0 0.0
        %672 = vmatprep.subr.mxu0 0.0
        %673 = vmatpush1.msra.mxu0 0.0
        %674 = vmatprep.subr.mxu0 0.0
        %675 = vmatpush1.msra.mxu0 0.0
        %676 = vmatprep.subr.mxu0 0.0
        %677 = vmatpush1.msra.mxu0 0.0
        %678 = vmatprep.subr.mxu0 0.0
        %679 = vmatpush1.msra.mxu0 0.0
        %680 = vmatprep.subr.mxu0 0.0
        %681 = vmatpush1.msra.mxu0 0.0
        %682 = vmatprep.subr.mxu0 0.0
        %683 = vmatpush1.msra.mxu0 0.0
        %684 = vmatprep.subr.mxu0 0.0
        %685 = vmatpush1.msra.mxu0 0.0
        %686 = vmatprep.subr.mxu0 0.0
        %687 = vmatpush1.msra.mxu0 0.0
        %688 = vmatprep.subr.mxu0 0.0
        %689 = vmatpush1.msra.mxu0 0.0
        %690 = vmatprep.subr.mxu0 0.0
        %691 = vmatpush1.msra.mxu0 0.0
        %692 = vmatprep.subr.mxu0 0.0
        %693 = vmatpush1.msra.mxu0 0.0
        %694 = vmatprep.subr.mxu0 0.0
        %695 = vmatpush1.msra.mxu0 0.0
        %696 = vmatprep.subr.mxu0 0.0
        %697 = vmatpush1.msra.mxu0 0.0
        %698 = vmatprep.subr.mxu0 0.0
        %699 = vmatpush1.msra.mxu0 0.0
        %700 = vmatprep.subr.mxu0 0.0
        %701 = vmatpush1.msra.mxu0 0.0
        %702 = vmatprep.subr.mxu0 0.0
        %703 = vmatpush1.msra.mxu0 0.0
        %704 = vmatprep.subr.mxu0 0.0
        %705 = vmatpush1.msra.mxu0 0.0
        %706 = vmatprep.subr.mxu0 0.0
        %707 = vmatpush1.msra.mxu0 0.0
        %708 = vmatprep.subr.mxu0 0.0
        %709 = vmatpush1.msra.mxu0 0.0
        %710 = vmatprep.subr.mxu0 0.0
        %711 = vmatpush1.msra.mxu0 0.0
        %712 = vmatprep.subr.mxu0 0.0
        %713 = vmatpush1.msra.mxu0 0.0
        %714 = vmatprep.subr.mxu0 0.0
        %715 = vmatpush1.msra.mxu0 0.0
        %716 = vmatprep.subr.mxu0 0.0
        %717 = vmatpush1.msra.mxu0 0.0
        %718 = vmatprep.subr.mxu0 0.0
        %719 = vmatpush1.msra.mxu0 0.0
        %720 = vmatprep.subr.mxu0 0.0
        %721 = vmatpush1.msra.mxu0 0.0
        %722 = vmatprep.mubr.f32.mxu0 0.0
        %723 = vmatmul.mubr.f32.gmra.mrb[0].mxu0 %v653
        %v724 = vpop.f32.mrb[0].mxu0
        %v725 = vadd.f32 0.0, %v724
        %v726 = vpop.f32.mrb[0].mxu0
        %727 = vmatprep.mubr.f32.mxu0 0.0
        %728 = vmatmul.mubr.f32.gmra.mrb[0].mxu0 %v656
        %v729 = vpop.f32.mrb[0].mxu0
        %v730 = vadd.f32 0.0, %v729
        %v731 = vpop.f32.mrb[0].mxu0
        %732 = vdwg.mxu0
        %v733 = vld [vmem:[%s6] sm:$0xf]
        %v735 = vsel %vm553, %v725, 0
        %v738 = vsel %vm553, %v730, 0
        %v741 = vsel %vm560, %v733, 0
        %743 = vmatprep.subr.mxu0 0.0
        %744 = vmatpush1.msra.mxu0 %v741
        %745 = vmatprep.subr.mxu0 0.0
        %746 = vmatpush1.msra.mxu0 0.0
        %747 = vmatprep.subr.mxu0 0.0
        %748 = vmatpush1.msra.mxu0 0.0
        %749 = vmatprep.subr.mxu0 0.0
        %750 = vmatpush1.msra.mxu0 0.0
        %751 = vmatprep.subr.mxu0 0.0
        %752 = vmatpush1.msra.mxu0 0.0
        %753 = vmatprep.subr.mxu0 0.0
        %754 = vmatpush1.msra.mxu0 0.0
        %755 = vmatprep.subr.mxu0 0.0
        %756 = vmatpush1.msra.mxu0 0.0
        %757 = vmatprep.subr.mxu0 0.0
        %758 = vmatpush1.msra.mxu0 0.0
        %759 = vmatprep.subr.mxu0 0.0
        %760 = vmatpush1.msra.mxu0 0.0
        %761 = vmatprep.subr.mxu0 0.0
        %762 = vmatpush1.msra.mxu0 0.0
        %763 = vmatprep.subr.mxu0 0.0
        %764 = vmatpush1.msra.mxu0 0.0
        %765 = vmatprep.subr.mxu0 0.0
        %766 = vmatpush1.msra.mxu0 0.0
        %767 = vmatprep.subr.mxu0 0.0
        %768 = vmatpush1.msra.mxu0 0.0
        %769 = vmatprep.subr.mxu0 0.0
        %770 = vmatpush1.msra.mxu0 0.0
        %771 = vmatprep.subr.mxu0 0.0
        %772 = vmatpush1.msra.mxu0 0.0
        %773 = vmatprep.subr.mxu0 0.0
        %774 = vmatpush1.msra.mxu0 0.0
        %775 = vmatprep.subr.mxu0 0.0
        %776 = vmatpush1.msra.mxu0 0.0
        %777 = vmatprep.subr.mxu0 0.0
        %778 = vmatpush1.msra.mxu0 0.0
        %779 = vmatprep.subr.mxu0 0.0
        %780 = vmatpush1.msra.mxu0 0.0
        %781 = vmatprep.subr.mxu0 0.0
        %782 = vmatpush1.msra.mxu0 0.0
        %783 = vmatprep.subr.mxu0 0.0
        %784 = vmatpush1.msra.mxu0 0.0
        %785 = vmatprep.subr.mxu0 0.0
        %786 = vmatpush1.msra.mxu0 0.0
        %787 = vmatprep.subr.mxu0 0.0
        %788 = vmatpush1.msra.mxu0 0.0
        %789 = vmatprep.subr.mxu0 0.0
        %790 = vmatpush1.msra.mxu0 0.0
        %791 = vmatprep.subr.mxu0 0.0
        %792 = vmatpush1.msra.mxu0 0.0
        %793 = vmatprep.subr.mxu0 0.0
        %794 = vmatpush1.msra.mxu0 0.0
        %795 = vmatprep.subr.mxu0 0.0
        %796 = vmatpush1.msra.mxu0 0.0
        %797 = vmatprep.subr.mxu0 0.0
        %798 = vmatpush1.msra.mxu0 0.0
        %799 = vmatprep.subr.mxu0 0.0
        %800 = vmatpush1.msra.mxu0 0.0
        %801 = vmatprep.subr.mxu0 0.0
        %802 = vmatpush1.msra.mxu0 0.0
        %803 = vmatprep.subr.mxu0 0.0
        %804 = vmatpush1.msra.mxu0 0.0
        %805 = vmatprep.subr.mxu0 0.0
        %806 = vmatpush1.msra.mxu0 0.0
        %807 = vmatprep.mubr.f32.mxu0 0.0
        %808 = vmatmul.mubr.f32.gmra.mrb[0].mxu0 %v735
        %v809 = vpop.f32.mrb[0].mxu0
        %v810 = vadd.f32 0.0, %v809
        %v811 = vpop.f32.mrb[0].mxu0
        %812 = vmatprep.mubr.f32.mxu0 0.0
        %813 = vmatmul.mubr.f32.gmra.mrb[0].mxu0 %v738
        %v814 = vpop.f32.mrb[0].mxu0
        %v815 = vadd.f32 0.0, %v814
        %v816 = vpop.f32.mrb[0].mxu0
        %817 = vdwg.mxu0
        %818 = vst.msk [vmem:[%s304] sm:$0xff] %vm350, %v810
        %819 = vst.msk [vmem:[%s304 + $0x8] sm:$0xff] %vm350, %v815
        %s820 = sand.u32 %s191, 1
        %s821 = scalar_lea.sflag [#allocation3], %s820
        %s822 = sand.u32 %s191, 1
        %s823 = smul.addr %s822, 16
        %s824 = scalar_lea.vmem [#allocation2], %s823
        // Predicated region
        $region49: #{auto_correlation_forward.1} parent=47 // pred_check
          %p825 = pneg %p201
        $region50: #{auto_correlation_forward.1} parent=47 // pred_check_branch
          %827 = sbr.rel (%p825) target = $region52
        $region51: #{auto_correlation_forward.1} parent=47 // pred_region
          %s828 = smul.u32 2, %s21
          %s830 = ssub.s32 256, 256
          %831 = vsyncadd %s821, %s830
          %s832 = smul.addr %s828, 128
          %s833 = scalar_lea.hbm %s7, %s832
          %s834 = sshll.u32 %s824, 4
          %s835 = int_to_ptr.vmem [resolvable:$true] %s834
          %840 = dma.vmem_to_hbm [thread:$0]  %s835, 256, %s833, %s821, 128, 128, 8
        $region52: #{auto_correlation_forward.1} parent=47 // pred_fallthru
          _
      $region48: #{auto_correlation_forward.1} parent=5 // pred_fallthru
        _
      %p841 = scmp.le.s32.totalorder 2, %s16
      // Predicated region
      $region53: #{auto_correlation_forward.1} parent=5 // pred_check
        %p842 = pneg %p841
      $region54: #{auto_correlation_forward.1} parent=5 // pred_check_branch
        %844 = sbr.rel (%p842) target = $region56
      $region55: #{auto_correlation_forward.1} parent=5 // pred_region
        %s845 = ssub.s32 %s16, 2
        // Predicated region
        $region57: #{auto_correlation_forward.1} parent=55 // pred_check
          %p846 = pneg %p207
        $region58: #{auto_correlation_forward.1} parent=55 // pred_check_branch
          %848 = sbr.rel (%p846) target = $region60
        $region59: #{auto_correlation_forward.1} parent=55 // pred_region
          %s849 = sand.u32 %s192, 1
          %s850 = scalar_lea.sflag [#allocation3], %s849
          %s851 = sand.u32 %s192, 1
          %s852 = smul.addr %s851, 16
          %s853 = scalar_lea.vmem [#allocation2], %s852
          %854 = dma.done %s850, 256
        $region60: #{auto_correlation_forward.1} parent=55 // pred_fallthru
          _
      $region56: #{auto_correlation_forward.1} parent=5 // pred_fallthru
        _
    $region6: #{auto_correlation_forward.1} parent=1 // loop_footer
      %s20 = sadd.s32 1, %s16
    $region7: #{auto_correlation_forward.1} parent=1 // loop_footer_branch
      %15 = sbr.rel target = $region3
    $region8: #{auto_correlation_forward.1} parent=1 // loop_exit
      _
    %855 = vsyncpa [#allocation3], 1
    %s856 = scalar_lea.sflag [#allocation3], 1
    %857 = vsyncpa %s856, 1

</llo_original>
